<compile_context>
chip_gen: v5e
topology: v5e:2x2
jax: 0.10.0
libtpu: 0.0.40
codegen_flags: <defaults>
</compile_context>

<pallas_src>
import functools

import jax
import jax.numpy as jnp
from jax.experimental import pallas as pl
from jax.experimental.pallas import tpu as pltpu

_LANE = 128
_VMEM_LIMIT = 48 * 1024 * 1024  # > v5e 16 MiB default, headroom on v7x (64 MiB)


def _round_up(x, m):
    return ((x + m - 1) // m) * m


def _pick_tile(dim_pad, preferred=256):
    # 256-wide tiles keep the v6e/v7x 2x256^2 MXUs full; fall back to 128
    # (lane width / v5e MXU size) when the padded dim is not 256-divisible.
    return preferred if dim_pad % preferred == 0 else _LANE


def _pad2d(x, rows, cols, dtype):
    r, c = x.shape
    return jnp.pad(x.astype(dtype), ((0, rows - r), (0, cols - c)))


# -----------------------------------------------------------------------------
# Phase 1: XW = X @ W   (tiled over node rows, bf16 in / bf16 out, f32 acc)
# -----------------------------------------------------------------------------
def _xw_kernel(x_ref, w_ref, o_ref):
    o_ref[...] = jnp.dot(
        x_ref[...], w_ref[...], preferred_element_type=jnp.float32
    ).astype(o_ref.dtype)


def xw_matmul(x_pad, w_pad):
    n_pad, fin_pad = x_pad.shape
    fout_pad = w_pad.shape[1]
    tm = _pick_tile(n_pad)
    return pl.pallas_call(
        _xw_kernel,
        out_shape=jax.ShapeDtypeStruct((n_pad, fout_pad), jnp.bfloat16),
        grid=(n_pad // tm,),
        in_specs=[
            pl.BlockSpec((tm, fin_pad), lambda i: (i, 0)),
            pl.BlockSpec((fin_pad, fout_pad), lambda i: (0, 0)),
        ],
        out_specs=pl.BlockSpec((tm, fout_pad), lambda i: (i, 0)),
        compiler_params=pltpu.CompilerParams(
            dimension_semantics=("parallel",),
            vmem_limit_bytes=_VMEM_LIMIT,
        ),
    )(x_pad, w_pad)


# -----------------------------------------------------------------------------
# Phase 2: H = A_hat @ XW + b (+ReLU) — tiled 3-D grid with f32 accumulator
# -----------------------------------------------------------------------------
def _spmm_kernel(a_ref, xw_ref, b_ref, o_ref, acc_ref, *, apply_relu):
    k = pl.program_id(2)

    @pl.when(k == 0)
    def _():
        acc_ref[...] = jnp.zeros_like(acc_ref)

    acc_ref[...] += jnp.dot(
        a_ref[...], xw_ref[...], preferred_element_type=jnp.float32
    )

    @pl.when(k == pl.num_programs(2) - 1)
    def _():
        h = acc_ref[...] + b_ref[...]
        if apply_relu:
            h = jnp.maximum(h, 0.0)
        o_ref[...] = h.astype(o_ref.dtype)


def spmm_layer(a_pad, xw_pad, b_pad, *, apply_relu):
    n_pad = a_pad.shape[0]
    fout_pad = xw_pad.shape[1]
    tm = tk = _pick_tile(n_pad)
    tn = _pick_tile(fout_pad)
    grid = (n_pad // tm, fout_pad // tn, n_pad // tk)
    return pl.pallas_call(
        functools.partial(_spmm_kernel, apply_relu=apply_relu),
        out_shape=jax.ShapeDtypeStruct((n_pad, fout_pad), jnp.bfloat16),
        grid=grid,
        in_specs=[
            pl.BlockSpec((tm, tk), lambda i, j, k: (i, k)),   # A_hat tile
            pl.BlockSpec((tk, tn), lambda i, j, k: (k, j)),   # XW tile
            pl.BlockSpec((1, tn), lambda i, j, k: (0, j)),    # bias tile
        ],
        out_specs=pl.BlockSpec((tm, tn), lambda i, j, k: (i, j)),
        scratch_shapes=[pltpu.VMEM((tm, tn), jnp.float32)],
        compiler_params=pltpu.CompilerParams(
            dimension_semantics=("parallel", "parallel", "arbitrary"),
            vmem_limit_bytes=_VMEM_LIMIT,
        ),
    )(a_pad, xw_pad, b_pad)


# -----------------------------------------------------------------------------
# Edge scoring: sum(src_h * dst_h, -1) (+sigmoid), tiled over edges,
# lane-dense (1, E_pad) output (features on sublanes, edges on lanes).
# -----------------------------------------------------------------------------
def _edge_score_kernel(src_ref, dst_ref, o_ref, *, use_sigmoid):
    prod = src_ref[...].astype(jnp.float32) * dst_ref[...].astype(jnp.float32)
    s = jnp.sum(prod, axis=0, keepdims=True)  # sublane reduce -> (1, te) lane-dense
    if use_sigmoid:
        s = jax.nn.sigmoid(s)
    o_ref[...] = s.astype(o_ref.dtype)


def edge_scores(src_ht, dst_ht, *, use_sigmoid):
    # src_ht / dst_ht: (f_pad, e_pad) bf16 — features on sublanes, edges on lanes.
    f_pad, e_pad = src_ht.shape
    te = _LANE
    out = pl.pallas_call(
        functools.partial(_edge_score_kernel, use_sigmoid=use_sigmoid),
        out_shape=jax.ShapeDtypeStruct((1, e_pad), jnp.float32),
        grid=(e_pad // te,),
        in_specs=[
            pl.BlockSpec((f_pad, te), lambda i: (0, i)),
            pl.BlockSpec((f_pad, te), lambda i: (0, i)),
        ],
        out_specs=pl.BlockSpec((1, te), lambda i: (0, i)),
        compiler_params=pltpu.CompilerParams(
            dimension_semantics=("parallel",),
            vmem_limit_bytes=_VMEM_LIMIT,
        ),
    )(src_ht, dst_ht)
    return out[0]


# -----------------------------------------------------------------------------
# Model glue (adjacency normalization, parameters, forward)
# -----------------------------------------------------------------------------
def build_normalized_adjacency(edge_src, edge_dst, num_nodes):
    """Dense A_hat with DGL norm='both' scaling; zero-degree nodes -> 0."""
    a = jnp.zeros((num_nodes, num_nodes), jnp.float32)
    a = a.at[edge_dst, edge_src].add(1.0)          # A[dst, src] = multiplicity
    out_deg = jnp.sum(a, axis=0)                   # out-degree of src nodes
    in_deg = jnp.sum(a, axis=1)                    # in-degree of dst nodes
    out_n = jnp.where(out_deg > 0, out_deg ** -0.5, 0.0)
    in_n = jnp.where(in_deg > 0, in_deg ** -0.5, 0.0)
    return a * in_n[:, None] * out_n[None, :]


def init_gcn_params(key, in_size, hid_size, out_size, num_layers):
    if num_layers < 1:
        raise ValueError("num_layers must be >= 1")
    if num_layers == 1:
        dims = [(in_size, out_size)]
    else:
        dims = [(in_size, hid_size)]
        dims += [(hid_size, hid_size)] * (num_layers - 2)
        dims += [(hid_size, out_size)]
    params = []
    for (fin, fout) in dims:
        key, kw = jax.random.split(key)
        scale = (2.0 / (fin + fout)) ** 0.5        # deterministic xavier-like init
        w = scale * jax.random.normal(kw, (fin, fout), jnp.float32)
        b = jnp.zeros((fout,), jnp.float32)
        params.append((w, b))
    return params


def gcn_forward(a_hat, feat, params, src, dst, *, use_sigmoid=True):
    num_layers = len(params)
    n = feat.shape[0]
    n_pad = _round_up(n, _LANE)

    # Pad + cast the dense normalized adjacency once (dominant HBM operand).
    a_pad = _pad2d(a_hat, n_pad, n_pad, jnp.bfloat16)

    fin0 = feat.shape[1]
    h = _pad2d(feat, n_pad, _round_up(fin0, _LANE), jnp.bfloat16)

    for i, (w, b) in enumerate(params):
        f_in, f_out = w.shape
        fin_pad = _round_up(f_in, _LANE)
        fout_pad = _round_up(f_out, _LANE)
        w_pad = _pad2d(w, fin_pad, fout_pad, jnp.bfloat16)
        b_pad = jnp.pad(b.astype(jnp.float32), (0, fout_pad - f_out)).reshape(
            1, fout_pad
        )
        xw = xw_matmul(h, w_pad)                                 # (n_pad, fout_pad) bf16
        h = spmm_layer(a_pad, xw, b_pad, apply_relu=(i != num_layers - 1))
        # dropout: identity (eval mode)

    # Edge scoring: gather endpoint features, lay edges along lanes.
    # TODO(synk): fuse the gather into the edge-score kernel via scalar-prefetched
    #             indices + pl.Element row gathers to avoid the HBM round trip.
    e = src.shape[0]
    e_pad = _round_up(e, _LANE)
    src_h = jnp.take(h, src, axis=0)
    dst_h = jnp.take(h, dst, axis=0)
    src_ht = jnp.pad(src_h, ((0, e_pad - e), (0, 0))).T          # (fout_pad, e_pad)
    dst_ht = jnp.pad(dst_h, ((0, e_pad - e), (0, 0))).T
    return edge_scores(src_ht, dst_ht, use_sigmoid=use_sigmoid)[:e]


# -----------------------------------------------------------------------------
# Demo
# -----------------------------------------------------------------------------
if __name__ == "__main__":
    key = jax.random.PRNGKey(0)
    num_nodes = 64
    in_size, hid_size, out_size = 16, 32, 16
    num_layers = 2
    num_graph_edges = 128
    num_query_edges = 8

    k_feat, k_gsrc, k_gdst, k_qsrc, k_qdst, k_params = jax.random.split(key, 6)

    feat = jax.random.normal(k_feat, (num_nodes, in_size), jnp.float32)
    graph_src = jax.random.randint(k_gsrc, (num_graph_edges,), 0, num_nodes)
    graph_dst = jax.random.randint(k_gdst, (num_graph_edges,), 0, num_nodes)
    query_src = jax.random.randint(k_qsrc, (num_query_edges,), 0, num_nodes)
    query_dst = jax.random.randint(k_qdst, (num_query_edges,), 0, num_nodes)

    a_hat = build_normalized_adjacency(graph_src, graph_dst, num_nodes)
    params = init_gcn_params(k_params, in_size, hid_size, out_size, num_layers)

    scores = gcn_forward(a_hat, feat, params, query_src, query_dst, use_sigmoid=True)
    scores = jax.block_until_ready(scores)

    assert scores.shape == (num_query_edges,)
    assert bool(jnp.all(jnp.isfinite(scores)))
    assert bool(jnp.all((scores >= 0.0) & (scores <= 1.0)))
    print("KERNEL_OK")
</pallas_src>

<mosaic_0001>
module attributes {stable_mosaic.version = 11 : i64} {
  func.func @_xw_kernel(%arg0: i32, %arg1: memref<128x128xbf16, #tpu.memory_space<vmem>>, %arg2: memref<128x128xbf16, #tpu.memory_space<vmem>>, %arg3: memref<128x128xbf16, #tpu.memory_space<vmem>>) attributes {dimension_semantics = [#tpu.dimension_semantics<parallel>], iteration_bounds = array<i64: 1>, scalar_prefetch = 0 : i64, scratch_operands = 0 : i64, tpu.core_type = #tpu.core_type<tc>, window_params = [{transform_indices = @transform_0, window_bounds = array<i64: 128, 128>}, {pipeline_mode = #tpu.pipeline_mode<synchronous>, transform_indices = @transform_1, window_bounds = array<i64: 128, 128>}, {transform_indices = @transform_2, window_bounds = array<i64: 128, 128>}]} {
    %c0 = arith.constant 0 : index
    %c0_0 = arith.constant 0 : index
    %0 = vector.load %arg1[%c0, %c0_0] : memref<128x128xbf16, #tpu.memory_space<vmem>>, vector<128x128xbf16>
    %c0_1 = arith.constant 0 : index
    %c0_2 = arith.constant 0 : index
    %1 = vector.load %arg2[%c0_1, %c0_2] : memref<128x128xbf16, #tpu.memory_space<vmem>>, vector<128x128xbf16>
    %cst = arith.constant dense<0.000000e+00> : vector<128x128xf32>
    %2 = tpu.matmul %0, %1, %cst {dimension_numbers = #tpu.dot_dimension_numbers<[1], [0], [0], [1], [0, 0, 1, 1], [], []>} : vector<128x128xbf16>, vector<128x128xbf16>, vector<128x128xf32> -> vector<128x128xf32>
    %3 = arith.truncf %2 : vector<128x128xf32> to vector<128x128xbf16>
    %c0_3 = arith.constant 0 : index
    %c0_4 = arith.constant 0 : index
    %4 = vector.load %arg3[%c0_3, %c0_4] : memref<128x128xbf16, #tpu.memory_space<vmem>>, vector<128x128xbf16>
    tpu.vector_store %arg3[%c0_3, %c0_4], %3 {strides = array<i32>} : memref<128x128xbf16, #tpu.memory_space<vmem>>, vector<128x128xbf16>,
    return
  }
  func.func @transform_0(%arg0: i32) -> (i32, i32) {
    %c0_i32 = arith.constant 0 : i32
    %c0_i32_0 = arith.constant 0 : i32
    return %arg0, %c0_i32 : i32, i32
  }
  func.func @transform_1(%arg0: i32) -> (i32, i32) {
    %c0_i32 = arith.constant 0 : i32
    %c0_i32_0 = arith.constant 0 : i32
    %c0_i32_1 = arith.constant 0 : i32
    return %c0_i32, %c0_i32_0 : i32, i32
  }
  func.func @transform_2(%arg0: i32) -> (i32, i32) {
    %c0_i32 = arith.constant 0 : i32
    %c0_i32_0 = arith.constant 0 : i32
    return %arg0, %c0_i32 : i32, i32
  }
}

</mosaic_0001>

<llo_original>
// kernel: tpu_custom_call.1
$region0: #{tpu_custom_call.1}
  #allocation0 [shape = 'u32[]', space=smem, size = 0x4, offset = 0x4, fixed_abs, tag = 'smem constant byte address 0x4 - core index']
  #allocation1 [shape = 'u32[72,128]{1,0:T(1,128)}', space=vmem, size = 0x9000, scoped, tag = 'internal scratch']
  %s0 = inlined_call_operand.hbm [shape: bf16[128,128], index: 0, kind: input, shape index: {}]
  %s1 = inlined_call_operand.hbm [shape: bf16[128,128], index: 1, kind: input, shape index: {}]
  %s2 = inlined_call_operand.hbm [shape: bf16[128,128], index: 2, kind: output, shape index: {}]
  %s3 = sld [smem:[#allocation0]]
  $region26: #{tpu_custom_call.1} parent=0
    _
  %s5 = ssub.s32 1, %s3
  %s6 = scalar_select 0, %s5, %s3
  $region1: #{tpu_custom_call.1} parent=0
    #allocation2 [shape = 'u8[32768]{0}', space=vmem, size = 0x8000, scoped, tag = 'input window, operand 0, single buffered']
    #allocation3 [shape = 's32[1]{0}', space=sflag, size = 0x4, scoped, tag = 'scoped memory for tpu_custom_call.1']
    #allocation4 [shape = 's32[1]{0}', space=sflag, size = 0x4, scoped, tag = 'scoped memory for tpu_custom_call.1']
    #allocation5 [shape = 'u8[32768]{0}', space=vmem, size = 0x8000, scoped, tag = 'input window, operand 1, single buffered']
    #allocation6 [shape = 's32[1]{0}', space=sflag, size = 0x4, scoped, tag = 'scoped memory for tpu_custom_call.1']
    #allocation7 [shape = 'u8[32768]{0}', space=vmem, size = 0x8000, scoped, tag = 'output window, operand 0, single buffered']
    %7 = vsyncpa [#allocation3], 0
    %8 = vsyncpa [#allocation6], 0
    %9 = vsyncpa [#allocation4], 0
    // Predicated region
    $region2: #{tpu_custom_call.1} parent=1 // pred_check
      _
    $region3: #{tpu_custom_call.1} parent=1 // pred_check_branch
      %11 = sbr.rel (0) target = $region5
    $region4: #{tpu_custom_call.1} parent=1 // pred_region
      %13 = vsyncadd [#allocation3], 0
      %s14 = sshll.u32 %s0, 4
      %s15 = int_to_ptr.hbm [resolvable:$true] %s14
      %s16 = sshll.u32 [#allocation2], 4
      %s17 = int_to_ptr.vmem [resolvable:$true] %s16
      %22 = dma.hbm_to_vmem [thread:$0]  %s15, 1024, %s17, [#allocation3], 64, 64, 4
    $region5: #{tpu_custom_call.1} parent=1 // pred_fallthru
      _
    // Predicated region
    $region6: #{tpu_custom_call.1} parent=1 // pred_check
      _
    $region7: #{tpu_custom_call.1} parent=1 // pred_check_branch
      %24 = sbr.rel (0) target = $region9
    $region8: #{tpu_custom_call.1} parent=1 // pred_region
      %26 = vsyncadd [#allocation6], 0
      %s27 = sshll.u32 %s1, 4
      %s28 = int_to_ptr.hbm [resolvable:$true] %s27
      %s29 = sshll.u32 [#allocation5], 4
      %s30 = int_to_ptr.vmem [resolvable:$true] %s29
      %35 = dma.hbm_to_vmem [thread:$0]  %s28, 1024, %s30, [#allocation6], 64, 64, 4
    $region9: #{tpu_custom_call.1} parent=1 // pred_fallthru
      _
    // Predicated region
    $region10: #{tpu_custom_call.1} parent=1 // pred_check
      _
    $region11: #{tpu_custom_call.1} parent=1 // pred_check_branch
      %37 = sbr.rel (0) target = $region13
    $region12: #{tpu_custom_call.1} parent=1 // pred_region
      %39 = dma.done [#allocation3], 1024
    $region13: #{tpu_custom_call.1} parent=1 // pred_fallthru
      _
    // Predicated region
    $region14: #{tpu_custom_call.1} parent=1 // pred_check
      _
    $region15: #{tpu_custom_call.1} parent=1 // pred_check_branch
      %41 = sbr.rel (0) target = $region17
    $region16: #{tpu_custom_call.1} parent=1 // pred_region
      %43 = dma.done [#allocation6], 1024
    $region17: #{tpu_custom_call.1} parent=1 // pred_fallthru
      _
    %v44 = vld [vmem:[#allocation2] sm:$0xf]
    %v45 = vld [vmem:[#allocation2 + $0x4] sm:$0xf]
    %v46 = vld [vmem:[#allocation2 + $0x8] sm:$0xf]
    %v47 = vld [vmem:[#allocation2 + $0xc] sm:$0xf]
    %v48 = vld [vmem:[#allocation2 + $0x10] sm:$0xf]
    %v49 = vld [vmem:[#allocation2 + $0x14] sm:$0xf]
    %v50 = vld [vmem:[#allocation2 + $0x18] sm:$0xf]
    %v51 = vld [vmem:[#allocation2 + $0x1c] sm:$0xf]
    %v52 = vld [vmem:[#allocation2 + $0x20] sm:$0xf]
    %v53 = vld [vmem:[#allocation2 + $0x24] sm:$0xf]
    %v54 = vld [vmem:[#allocation2 + $0x28] sm:$0xf]
    %v55 = vld [vmem:[#allocation2 + $0x2c] sm:$0xf]
    %v56 = vld [vmem:[#allocation2 + $0x30] sm:$0xf]
    %v57 = vld [vmem:[#allocation2 + $0x34] sm:$0xf]
    %v58 = vld [vmem:[#allocation2 + $0x38] sm:$0xf]
    %v59 = vld [vmem:[#allocation2 + $0x3c] sm:$0xf]
    %v60 = vld [vmem:[#allocation5] sm:$0xf]
    %v61 = vld [vmem:[#allocation5 + $0x4] sm:$0xf]
    %v62 = vld [vmem:[#allocation5 + $0x8] sm:$0xf]
    %v63 = vld [vmem:[#allocation5 + $0xc] sm:$0xf]
    %v64 = vld [vmem:[#allocation5 + $0x10] sm:$0xf]
    %v65 = vld [vmem:[#allocation5 + $0x14] sm:$0xf]
    %v66 = vld [vmem:[#allocation5 + $0x18] sm:$0xf]
    %v67 = vld [vmem:[#allocation5 + $0x1c] sm:$0xf]
    %v68 = vld [vmem:[#allocation5 + $0x20] sm:$0xf]
    %v69 = vld [vmem:[#allocation5 + $0x24] sm:$0xf]
    %v70 = vld [vmem:[#allocation5 + $0x28] sm:$0xf]
    %v71 = vld [vmem:[#allocation5 + $0x2c] sm:$0xf]
    %v72 = vld [vmem:[#allocation5 + $0x30] sm:$0xf]
    %v73 = vld [vmem:[#allocation5 + $0x34] sm:$0xf]
    %v74 = vld [vmem:[#allocation5 + $0x38] sm:$0xf]
    %v75 = vld [vmem:[#allocation5 + $0x3c] sm:$0xf]
    %v92 = vunpack.c.l.b16 %v44
    %v93 = vunpack.c.l.b16 %v45
    %v94 = vunpack.c.l.b16 %v46
    %v95 = vunpack.c.l.b16 %v47
    %v96 = vunpack.c.l.b16 %v48
    %v97 = vunpack.c.l.b16 %v49
    %v98 = vunpack.c.l.b16 %v50
    %v99 = vunpack.c.l.b16 %v51
    %v100 = vunpack.c.l.b16 %v52
    %v101 = vunpack.c.l.b16 %v53
    %v102 = vunpack.c.l.b16 %v54
    %v103 = vunpack.c.l.b16 %v55
    %v104 = vunpack.c.l.b16 %v56
    %v105 = vunpack.c.l.b16 %v57
    %v106 = vunpack.c.l.b16 %v58
    %v107 = vunpack.c.l.b16 %v59
    %v108 = vpack.c.b16 %v93, %v92
    %v109 = vpack.c.b16 %v95, %v94
    %v110 = vpack.c.b16 %v97, %v96
    %v111 = vpack.c.b16 %v99, %v98
    %v112 = vpack.c.b16 %v101, %v100
    %v113 = vpack.c.b16 %v103, %v102
    %v114 = vpack.c.b16 %v105, %v104
    %v115 = vpack.c.b16 %v107, %v106
    %v140 = vunpack.c.l.b16 %v60
    %v141 = vunpack.c.l.b16 %v61
    %v142 = vunpack.c.l.b16 %v62
    %v143 = vunpack.c.l.b16 %v63
    %v144 = vunpack.c.l.b16 %v64
    %v145 = vunpack.c.l.b16 %v65
    %v146 = vunpack.c.l.b16 %v66
    %v147 = vunpack.c.l.b16 %v67
    %v148 = vunpack.c.l.b16 %v68
    %v149 = vunpack.c.l.b16 %v69
    %v150 = vunpack.c.l.b16 %v70
    %v151 = vunpack.c.l.b16 %v71
    %v152 = vunpack.c.l.b16 %v72
    %v153 = vunpack.c.l.b16 %v73
    %v154 = vunpack.c.l.b16 %v74
    %v155 = vunpack.c.l.b16 %v75
    %v156 = vpack.c.b16 %v141, %v140
    %v157 = vpack.c.b16 %v143, %v142
    %v158 = vpack.c.b16 %v145, %v144
    %v159 = vpack.c.b16 %v147, %v146
    %v160 = vpack.c.b16 %v149, %v148
    %v161 = vpack.c.b16 %v151, %v150
    %v162 = vpack.c.b16 %v153, %v152
    %v163 = vpack.c.b16 %v155, %v154
    %172 = vmatpush.bf16.msra.mxu0 %v163
    %173 = vmatpush.bf16.msra.mxu0 %v162
    %174 = vmatpush.bf16.msra.mxu0 %v161
    %175 = vmatpush.bf16.msra.mxu0 %v160
    %176 = vmatpush.bf16.msra.mxu0 %v159
    %177 = vmatpush.bf16.msra.mxu0 %v158
    %178 = vmatpush.bf16.msra.mxu0 %v157
    %179 = vmatpush.bf16.msra.mxu0 %v156
    %180 = vmatmul.bf16.gmra.mxu0 %v108
    %v181 = vpop.f32.mrf.mxu0
    %v182 = vadd.f32 0.0, %v181
    %v183 = vpop.f32.mrf.mxu0
    %v184 = vadd.f32 0.0, %v183
    %185 = vmatmul.bf16.gmra.mxu0 %v109
    %v186 = vpop.f32.mrf.mxu0
    %v187 = vadd.f32 0.0, %v186
    %v188 = vpop.f32.mrf.mxu0
    %v189 = vadd.f32 0.0, %v188
    %190 = vmatmul.bf16.gmra.mxu0 %v110
    %v191 = vpop.f32.mrf.mxu0
    %v192 = vadd.f32 0.0, %v191
    %v193 = vpop.f32.mrf.mxu0
    %v194 = vadd.f32 0.0, %v193
    %195 = vmatmul.bf16.gmra.mxu0 %v111
    %v196 = vpop.f32.mrf.mxu0
    %v197 = vadd.f32 0.0, %v196
    %v198 = vpop.f32.mrf.mxu0
    %v199 = vadd.f32 0.0, %v198
    %200 = vmatmul.bf16.gmra.mxu0 %v112
    %v201 = vpop.f32.mrf.mxu0
    %v202 = vadd.f32 0.0, %v201
    %v203 = vpop.f32.mrf.mxu0
    %v204 = vadd.f32 0.0, %v203
    %205 = vmatmul.bf16.gmra.mxu0 %v113
    %v206 = vpop.f32.mrf.mxu0
    %v207 = vadd.f32 0.0, %v206
    %v208 = vpop.f32.mrf.mxu0
    %v209 = vadd.f32 0.0, %v208
    %210 = vmatmul.bf16.gmra.mxu0 %v114
    %v211 = vpop.f32.mrf.mxu0
    %v212 = vadd.f32 0.0, %v211
    %v213 = vpop.f32.mrf.mxu0
    %v214 = vadd.f32 0.0, %v213
    %215 = vmatmul.bf16.gmra.mxu0 %v115
    %v216 = vpop.f32.mrf.mxu0
    %v217 = vadd.f32 0.0, %v216
    %v218 = vpop.f32.mrf.mxu0
    %v219 = vadd.f32 0.0, %v218
    %220 = vdwg.mxu0
    %v221 = vpack.c.bf16 %v182, %v182
    %v222 = vpack.c.bf16 %v184, %v184
    %v223 = vpack.c.bf16 %v187, %v187
    %v224 = vpack.c.bf16 %v189, %v189
    %v225 = vpack.c.bf16 %v192, %v192
    %v226 = vpack.c.bf16 %v194, %v194
    %v227 = vpack.c.bf16 %v197, %v197
    %v228 = vpack.c.bf16 %v199, %v199
    %v229 = vpack.c.bf16 %v202, %v202
    %v230 = vpack.c.bf16 %v204, %v204
    %v231 = vpack.c.bf16 %v207, %v207
    %v232 = vpack.c.bf16 %v209, %v209
    %v233 = vpack.c.bf16 %v212, %v212
    %v234 = vpack.c.bf16 %v214, %v214
    %v235 = vpack.c.bf16 %v217, %v217
    %v236 = vpack.c.bf16 %v219, %v219
    %237 = vst [vmem:[#allocation7] sm:$0xf] %v221
    %238 = vst [vmem:[#allocation7 + $0x4] sm:$0xf] %v222
    %239 = vst [vmem:[#allocation7 + $0x8] sm:$0xf] %v223
    %240 = vst [vmem:[#allocation7 + $0xc] sm:$0xf] %v224
    %241 = vst [vmem:[#allocation7 + $0x10] sm:$0xf] %v225
    %242 = vst [vmem:[#allocation7 + $0x14] sm:$0xf] %v226
    %243 = vst [vmem:[#allocation7 + $0x18] sm:$0xf] %v227
    %244 = vst [vmem:[#allocation7 + $0x1c] sm:$0xf] %v228
    %245 = vst [vmem:[#allocation7 + $0x20] sm:$0xf] %v229
    %246 = vst [vmem:[#allocation7 + $0x24] sm:$0xf] %v230
    %247 = vst [vmem:[#allocation7 + $0x28] sm:$0xf] %v231
    %248 = vst [vmem:[#allocation7 + $0x2c] sm:$0xf] %v232
    %249 = vst [vmem:[#allocation7 + $0x30] sm:$0xf] %v233
    %250 = vst [vmem:[#allocation7 + $0x34] sm:$0xf] %v234
    %251 = vst [vmem:[#allocation7 + $0x38] sm:$0xf] %v235
    %252 = vst [vmem:[#allocation7 + $0x3c] sm:$0xf] %v236
    // Predicated region
    $region18: #{tpu_custom_call.1} parent=1 // pred_check
      _
    $region19: #{tpu_custom_call.1} parent=1 // pred_check_branch
      %254 = sbr.rel (0) target = $region21
    $region20: #{tpu_custom_call.1} parent=1 // pred_region
      %256 = vsyncadd [#allocation4], 0
      %s257 = sshll.u32 [#allocation7], 4
      %s258 = int_to_ptr.vmem [resolvable:$true] %s257
      %s259 = sshll.u32 %s2, 4
      %s260 = int_to_ptr.hbm [resolvable:$true] %s259
      %265 = dma.vmem_to_hbm [thread:$0]  %s258, 1024, %s260, [#allocation4], 64, 64, 4
    $region21: #{tpu_custom_call.1} parent=1 // pred_fallthru
      _
    // Predicated region
    $region22: #{tpu_custom_call.1} parent=1 // pred_check
      _
    $region23: #{tpu_custom_call.1} parent=1 // pred_check_branch
      %267 = sbr.rel (0) target = $region25
    $region24: #{tpu_custom_call.1} parent=1 // pred_region
      %269 = dma.done [#allocation4], 1024
    $region25: #{tpu_custom_call.1} parent=1 // pred_fallthru
      _
    %270 = vsyncpa [#allocation3], 1
    %271 = vsyncpa [#allocation6], 1
    %272 = vsyncpa [#allocation4], 1

</llo_original>
